<compile_context>
chip_gen: v7x
topology: tpu7x:2x2x1
jax: 0.10.0
libtpu: 0.0.40
codegen_flags: <defaults>
</compile_context>

<pallas_src>
import jax
import jax.numpy as jnp
from jax.experimental import pallas as pl
from jax.experimental.pallas import tpu as pltpu

LANE = 128  # output class dim padded to one full lane-width for dense stores


def net_kernel(x_ref, w1_ref, b1_ref, w2_ref, b2_ref, o_ref):
    # x_ref:  (TB, D_in)  bf16   -- streamed per grid step
    # w1_ref: (D_in, H)   bf16   -- resident
    # b1_ref: (1, H)      f32    -- resident
    # w2_ref: (H, LANE)   bf16   -- resident, zero-padded past class 1
    # b2_ref: (1, LANE)   f32    -- resident, zero-padded past class 1
    # o_ref:  (TB, LANE)  f32    -- only columns [0, 2) are meaningful
    # Hidden layer: bf16 MXU inputs, f32 accumulate; bias + tanh in f32.
    h = jnp.dot(x_ref[...], w1_ref[...], preferred_element_type=jnp.float32)
    h = jnp.tanh(h + b1_ref[...])
    # Output layer: cast activations to bf16 for the MXU, accumulate in f32.
    logits = jnp.dot(h.astype(jnp.bfloat16), w2_ref[...],
                     preferred_element_type=jnp.float32) + b2_ref[...]
    # Explicit, numerically stable 2-class log_softmax (branch-free, VPU/EUP only).
    l0 = logits[:, 0:1]
    l1 = logits[:, 1:2]
    lse = jnp.maximum(l0, l1) + jnp.log(1.0 + jnp.exp(-jnp.abs(l0 - l1)))
    # Lane-dense [TB, 128] store; padding columns are sliced away in the wrapper.
    o_ref[...] = logits - lse


def net_forward(x, w1, b1, w2, b2, *, block_b=512):
    """x: [B, D_in] f32; w1: [D_in, H]; b1: [1, H]; w2: [H, 2]; b2: [1, 2] -> [B, 2] f32."""
    B, d_in = x.shape
    h_dim = w1.shape[1]
    n_cls = w2.shape[1]

    # Cast MXU operands to bf16 in the wrapper (also halves their HBM traffic).
    x_bf = x.astype(jnp.bfloat16)
    w1_bf = w1.astype(jnp.bfloat16)
    # Pad the class dim to a full 128-lane width -> unmasked, lane-dense output stores.
    w2_p = jnp.zeros((h_dim, LANE), jnp.bfloat16).at[:, :n_cls].set(w2.astype(jnp.bfloat16))
    b2_p = jnp.zeros((1, LANE), jnp.float32).at[:, :n_cls].set(b2.astype(jnp.float32))
    b1_f = b1.astype(jnp.float32).reshape(1, h_dim)

    # Batch tile: as large as sensible, multiple of 8 (f32 sublane). Footprint is
    # tiny (weights ~0.4 MiB + 2 x TB x D_in bf16 + 2 x TB x 128 f32), so 512 rows
    # is comfortably inside a 32 MiB scoped-VMEM budget on every generation.
    tb = min(block_b, max(8, ((B + 7) // 8) * 8))
    b_pad = ((B + tb - 1) // tb) * tb
    if b_pad != B:
        x_bf = jnp.pad(x_bf, ((0, b_pad - B), (0, 0)))
    grid = (b_pad // tb,)

    flops = 2 * b_pad * (d_in * h_dim + h_dim * LANE)
    transcendentals = b_pad * (h_dim + 2)                      # tanh + exp/log
    bytes_accessed = (x_bf.size * 2 + w1_bf.size * 2 + w2_p.size * 2
                      + b1_f.size * 4 + b2_p.size * 4 + b_pad * LANE * 4)

    out = pl.pallas_call(
        net_kernel,
        out_shape=jax.ShapeDtypeStruct((b_pad, LANE), jnp.float32),
        grid_spec=pltpu.PrefetchScalarGridSpec(
            num_scalar_prefetch=0,
            grid=grid,
            in_specs=[
                pl.BlockSpec((tb, d_in), lambda i: (i, 0)),     # x tile (streamed)
                pl.BlockSpec((d_in, h_dim), lambda i: (0, 0)),  # w1 (resident)
                pl.BlockSpec((1, h_dim), lambda i: (0, 0)),     # b1 (resident)
                pl.BlockSpec((h_dim, LANE), lambda i: (0, 0)),  # w2 padded (resident)
                pl.BlockSpec((1, LANE), lambda i: (0, 0)),      # b2 padded (resident)
            ],
            out_specs=pl.BlockSpec((tb, LANE), lambda i: (i, 0)),
        ),
        compiler_params=pltpu.CompilerParams(
            dimension_semantics=("parallel",),
            vmem_limit_bytes=32 * 1024 * 1024,
        ),
        cost_estimate=pl.CostEstimate(
            flops=flops,
            transcendentals=transcendentals,
            bytes_accessed=bytes_accessed,
        ),
    )(x_bf, w1_bf, b1_f, w2_p, b2_p)

    return out[:B, :n_cls]


def init_params(key, input_size, hidden_layer_size, n_classes=2):
    """Deterministic PyTorch-style (uniform +/- 1/sqrt(fan_in)) init."""
    k1, k2, k3, k4 = jax.random.split(key, 4)
    lim1 = 1.0 / jnp.sqrt(jnp.float32(input_size))
    lim2 = 1.0 / jnp.sqrt(jnp.float32(hidden_layer_size))
    w1 = jax.random.uniform(k1, (input_size, hidden_layer_size), jnp.float32, -lim1, lim1)
    b1 = jax.random.uniform(k2, (1, hidden_layer_size), jnp.float32, -lim1, lim1)
    w2 = jax.random.uniform(k3, (hidden_layer_size, n_classes), jnp.float32, -lim2, lim2)
    b2 = jax.random.uniform(k4, (1, n_classes), jnp.float32, -lim2, lim2)
    return w1, b1, w2, b2


if __name__ == "__main__":
    # Module's actual feature sizes (input_size=300, hidden = 2 * input), small batch.
    batch = 16
    input_size = 300
    hidden_layer_size = input_size * 2

    key = jax.random.PRNGKey(0)
    kx, kp = jax.random.split(key)
    x = jax.random.normal(kx, (batch, input_size), jnp.float32)
    w1, b1, w2, b2 = init_params(kp, input_size, hidden_layer_size)

    out = net_forward(x, w1, b1, w2, b2)
    out = jax.block_until_ready(out)
    assert out.shape == (batch, 2)

    # Reference with the same bf16-input / f32-accumulate matmuls (tight tolerance).
    h_ref = jnp.tanh(
        jnp.dot(x.astype(jnp.bfloat16), w1.astype(jnp.bfloat16),
                preferred_element_type=jnp.float32) + b1)
    logits_ref = jnp.dot(h_ref.astype(jnp.bfloat16), w2.astype(jnp.bfloat16),
                         preferred_element_type=jnp.float32) + b2
    ref_bf = jax.nn.log_softmax(logits_ref, axis=-1)
    assert jnp.allclose(out, ref_bf, atol=2e-3, rtol=2e-3)

    # Looser check against the full-f32 reference (bf16 MXU inputs lose ~3 decimal digits).
    ref_f32 = jax.nn.log_softmax(jnp.tanh(x @ w1 + b1) @ w2 + b2, axis=-1)
    assert jnp.allclose(out, ref_f32, atol=5e-2, rtol=5e-2)

    print("KERNEL_OK")
</pallas_src>

<mosaic_0001>
module attributes {stable_mosaic.version = 11 : i64} {
  func.func @net_kernel(%arg0: i32, %arg1: memref<16x300xbf16, #tpu.memory_space<vmem>>, %arg2: memref<300x600xbf16, #tpu.memory_space<vmem>>, %arg3: memref<1x600xf32, #tpu.memory_space<vmem>>, %arg4: memref<600x128xbf16, #tpu.memory_space<vmem>>, %arg5: memref<1x128xf32, #tpu.memory_space<vmem>>, %arg6: memref<16x128xf32, #tpu.memory_space<vmem>>) attributes {dimension_semantics = [#tpu.dimension_semantics<parallel>], iteration_bounds = array<i64: 1>, scalar_prefetch = 0 : i64, scratch_operands = 0 : i64, tpu.core_type = #tpu.core_type<tc>, window_params = [{transform_indices = @transform_0, window_bounds = array<i64: 16, 300>}, {pipeline_mode = #tpu.pipeline_mode<synchronous>, transform_indices = @transform_1, window_bounds = array<i64: 300, 600>}, {pipeline_mode = #tpu.pipeline_mode<synchronous>, transform_indices = @transform_2, window_bounds = array<i64: 1, 600>}, {pipeline_mode = #tpu.pipeline_mode<synchronous>, transform_indices = @transform_3, window_bounds = array<i64: 600, 128>}, {pipeline_mode = #tpu.pipeline_mode<synchronous>, transform_indices = @transform_4, window_bounds = array<i64: 1, 128>}, {transform_indices = @transform_5, window_bounds = array<i64: 16, 128>}]} {
    %c0 = arith.constant 0 : index
    %c0_0 = arith.constant 0 : index
    %0 = vector.load %arg1[%c0, %c0_0] : memref<16x300xbf16, #tpu.memory_space<vmem>>, vector<16x300xbf16>
    %c0_1 = arith.constant 0 : index
    %c0_2 = arith.constant 0 : index
    %1 = vector.load %arg2[%c0_1, %c0_2] : memref<300x600xbf16, #tpu.memory_space<vmem>>, vector<300x600xbf16>
    %cst = arith.constant dense<0.000000e+00> : vector<16x600xf32>
    %2 = tpu.matmul %0, %1, %cst {dimension_numbers = #tpu.dot_dimension_numbers<[1], [0], [0], [1], [0, 0, 1, 1], [], []>} : vector<16x300xbf16>, vector<300x600xbf16>, vector<16x600xf32> -> vector<16x600xf32>
    %c0_3 = arith.constant 0 : index
    %c0_4 = arith.constant 0 : index
    %3 = vector.load %arg3[%c0_3, %c0_4] : memref<1x600xf32, #tpu.memory_space<vmem>>, vector<1x600xf32>
    %4 = vector.broadcast %3 : vector<1x600xf32> to vector<16x600xf32>
    %5 = arith.addf %2, %4 : vector<16x600xf32>
    %6 = math.tanh %5 : vector<16x600xf32>
    %7 = arith.truncf %6 : vector<16x600xf32> to vector<16x600xbf16>
    %c0_5 = arith.constant 0 : index
    %c0_6 = arith.constant 0 : index
    %8 = vector.load %arg4[%c0_5, %c0_6] : memref<600x128xbf16, #tpu.memory_space<vmem>>, vector<600x128xbf16>
    %cst_7 = arith.constant dense<0.000000e+00> : vector<16x128xf32>
    %9 = tpu.matmul %7, %8, %cst_7 {dimension_numbers = #tpu.dot_dimension_numbers<[1], [0], [0], [1], [0, 0, 1, 1], [], []>} : vector<16x600xbf16>, vector<600x128xbf16>, vector<16x128xf32> -> vector<16x128xf32>
    %c0_8 = arith.constant 0 : index
    %c0_9 = arith.constant 0 : index
    %10 = vector.load %arg5[%c0_8, %c0_9] : memref<1x128xf32, #tpu.memory_space<vmem>>, vector<1x128xf32>
    %11 = vector.broadcast %10 : vector<1x128xf32> to vector<16x128xf32>
    %12 = arith.addf %9, %11 : vector<16x128xf32>
    %13 = vector.extract_strided_slice %12 {offsets = [0, 0], sizes = [16, 1], strides = [1, 1]} : vector<16x128xf32> to vector<16x1xf32>
    %14 = vector.extract_strided_slice %12 {offsets = [0, 1], sizes = [16, 1], strides = [1, 1]} : vector<16x128xf32> to vector<16x1xf32>
    %15 = arith.maximumf %13, %14 : vector<16x1xf32>
    %16 = arith.subf %13, %14 : vector<16x1xf32>
    %17 = math.absf %16 : vector<16x1xf32>
    %cst_10 = arith.constant 0.000000e+00 : f32
    %18 = vector.broadcast %cst_10 : f32 to vector<16x1xf32>
    %19 = arith.subf %18, %17 : vector<16x1xf32>
    %20 = math.exp %19 : vector<16x1xf32>
    %cst_11 = arith.constant 1.000000e+00 : f32
    %21 = vector.broadcast %cst_11 : f32 to vector<16x1xf32>
    %22 = arith.addf %21, %20 : vector<16x1xf32>
    %23 = math.log %22 : vector<16x1xf32>
    %24 = arith.addf %15, %23 : vector<16x1xf32>
    %25 = vector.broadcast %24 : vector<16x1xf32> to vector<16x128xf32>
    %26 = arith.subf %12, %25 : vector<16x128xf32>
    %c0_12 = arith.constant 0 : index
    %c0_13 = arith.constant 0 : index
    %27 = vector.load %arg6[%c0_12, %c0_13] : memref<16x128xf32, #tpu.memory_space<vmem>>, vector<16x128xf32>
    tpu.vector_store %arg6[%c0_12, %c0_13], %26 {strides = array<i32>} : memref<16x128xf32, #tpu.memory_space<vmem>>, vector<16x128xf32>,
    return
  }
  func.func @transform_0(%arg0: i32) -> (i32, i32) {
    %c0_i32 = arith.constant 0 : i32
    %c0_i32_0 = arith.constant 0 : i32
    return %arg0, %c0_i32 : i32, i32
  }
  func.func @transform_1(%arg0: i32) -> (i32, i32) {
    %c0_i32 = arith.constant 0 : i32
    %c0_i32_0 = arith.constant 0 : i32
    %c0_i32_1 = arith.constant 0 : i32
    return %c0_i32, %c0_i32_0 : i32, i32
  }
  func.func @transform_2(%arg0: i32) -> (i32, i32) {
    %c0_i32 = arith.constant 0 : i32
    %c0_i32_0 = arith.constant 0 : i32
    %c0_i32_1 = arith.constant 0 : i32
    return %c0_i32, %c0_i32_0 : i32, i32
  }
  func.func @transform_3(%arg0: i32) -> (i32, i32) {
    %c0_i32 = arith.constant 0 : i32
    %c0_i32_0 = arith.constant 0 : i32
    %c0_i32_1 = arith.constant 0 : i32
    return %c0_i32, %c0_i32_0 : i32, i32
  }
  func.func @transform_4(%arg0: i32) -> (i32, i32) {
    %c0_i32 = arith.constant 0 : i32
    %c0_i32_0 = arith.constant 0 : i32
    %c0_i32_1 = arith.constant 0 : i32
    return %c0_i32, %c0_i32_0 : i32, i32
  }
  func.func @transform_5(%arg0: i32) -> (i32, i32) {
    %c0_i32 = arith.constant 0 : i32
    %c0_i32_0 = arith.constant 0 : i32
    return %arg0, %c0_i32 : i32, i32
  }
}

</mosaic_0001>

<llo_original>
// kernel: tpu_custom_call.1
$region0: #{tpu_custom_call.1}
  #allocation0 [shape = 'u32[]', space=smem, size = 0x4, offset = 0x4, fixed_abs, tag = 'smem constant byte address 0x4 - core index']
  #allocation1 [shape = 'u32[144,128]{1,0:T(1,128)}', space=vmem, size = 0x12000, scoped, tag = 'internal scratch']
  %s0 = inlined_call_operand.hbm [shape: bf16[16,300], index: 0, kind: input, shape index: {}]
  %s1 = inlined_call_operand.hbm [shape: bf16[300,600], index: 1, kind: input, shape index: {}]
  %s2 = inlined_call_operand.vmem [shape: f32[1,600], index: 2, kind: input, shape index: {}]
  %s3 = inlined_call_operand.hbm [shape: bf16[600,128], index: 3, kind: input, shape index: {}]
  %s4 = inlined_call_operand.vmem [shape: f32[1,128], index: 4, kind: input, shape index: {}]
  %s5 = inlined_call_operand.hbm [shape: f32[16,128], index: 5, kind: output, shape index: {}]
  %s6 = sld [smem:[#allocation0]]
  $region42: #{tpu_custom_call.1} parent=0
    _
  %s8 = ssub.s32 1, %s6
  %s9 = scalar_select 0, %s8, %s6
  $region1: #{tpu_custom_call.1} parent=0
    #allocation2 [shape = 'u8[12288]{0}', space=vmem, size = 0x3000, scoped, tag = 'input window, operand 0, single buffered']
    #allocation3 [shape = 's32[1]{0}', space=sflag, size = 0x4, scoped, tag = 'scoped memory for tpu_custom_call.1']
    #allocation4 [shape = 's32[1]{0}', space=sflag, size = 0x4, scoped, tag = 'scoped memory for tpu_custom_call.1']
    #allocation5 [shape = 'u8[389120]{0}', space=vmem, size = 0x5f000, scoped, tag = 'input window, operand 1, single buffered']
    #allocation6 [shape = 's32[1]{0}', space=sflag, size = 0x4, scoped, tag = 'scoped memory for tpu_custom_call.1']
    #allocation7 [shape = 'u8[153600]{0}', space=vmem, size = 0x25800, scoped, tag = 'input window, operand 3, single buffered']
    #allocation8 [shape = 'u8[8192]{0}', space=vmem, size = 0x2000, scoped, tag = 'output window, operand 0, single buffered']
    %10 = vsyncpa [#allocation3], 0
    %11 = vsyncpa [#allocation6], 0
    %12 = vsyncpa [#allocation4], 0
    // Predicated region
    $region2: #{tpu_custom_call.1} parent=1 // pred_check
      _
    $region3: #{tpu_custom_call.1} parent=1 // pred_check_branch
      %14 = sbr.rel (0) target = $region5
    $region4: #{tpu_custom_call.1} parent=1 // pred_region
      %s16 = ssub.s32 384, 384
      %17 = vsyncadd [#allocation3], %s16
      %s18 = sshll.u32 [#allocation2], 4
      %s19 = int_to_ptr.vmem [resolvable:$true] %s18
      %24 = dma.hbm_to_vmem [thread:$0]  %s0, 384, %s19, [#allocation3], 192, 192, 12
    $region5: #{tpu_custom_call.1} parent=1 // pred_fallthru
      _
    // Predicated region
    $region6: #{tpu_custom_call.1} parent=1 // pred_check
      _
    $region7: #{tpu_custom_call.1} parent=1 // pred_check_branch
      %26 = sbr.rel (0) target = $region9
    $region8: #{tpu_custom_call.1} parent=1 // pred_region
      %s28 = ssub.s32 12160, 12160
      %29 = vsyncadd [#allocation6], %s28
      %s30 = sshll.u32 [#allocation5], 4
      %s31 = int_to_ptr.vmem [resolvable:$true] %s30
      %36 = dma.hbm_to_vmem [thread:$0]  %s1, 12160, %s31, [#allocation6], 320, 320, 20
    $region9: #{tpu_custom_call.1} parent=1 // pred_fallthru
      _
    // Predicated region
    $region10: #{tpu_custom_call.1} parent=1 // pred_check
      _
    $region11: #{tpu_custom_call.1} parent=1 // pred_check_branch
      %38 = sbr.rel (0) target = $region13
    $region12: #{tpu_custom_call.1} parent=1 // pred_region
      _
    $region13: #{tpu_custom_call.1} parent=1 // pred_fallthru
      _
    // Predicated region
    $region14: #{tpu_custom_call.1} parent=1 // pred_check
      _
    $region15: #{tpu_custom_call.1} parent=1 // pred_check_branch
      %40 = sbr.rel (0) target = $region17
    $region16: #{tpu_custom_call.1} parent=1 // pred_region
      %s42 = ssub.s32 4800, 4800
      %43 = vsyncadd [#allocation6], %s42
      %s44 = sshll.u32 [#allocation7], 4
      %s45 = int_to_ptr.vmem [resolvable:$true] %s44
      %50 = dma.hbm_to_vmem [thread:$0]  %s3, 4800, %s45, [#allocation6], 64, 64, 4
    $region17: #{tpu_custom_call.1} parent=1 // pred_fallthru
      _
    // Predicated region
    $region18: #{tpu_custom_call.1} parent=1 // pred_check
      _
    $region19: #{tpu_custom_call.1} parent=1 // pred_check_branch
      %52 = sbr.rel (0) target = $region21
    $region20: #{tpu_custom_call.1} parent=1 // pred_region
      _
    $region21: #{tpu_custom_call.1} parent=1 // pred_fallthru
      _
    // Predicated region
    $region22: #{tpu_custom_call.1} parent=1 // pred_check
      _
    $region23: #{tpu_custom_call.1} parent=1 // pred_check_branch
      %54 = sbr.rel (0) target = $region25
    $region24: #{tpu_custom_call.1} parent=1 // pred_region
      %55 = dma.done [#allocation3], 384
    $region25: #{tpu_custom_call.1} parent=1 // pred_fallthru
      _
    // Predicated region
    $region26: #{tpu_custom_call.1} parent=1 // pred_check
      _
    $region27: #{tpu_custom_call.1} parent=1 // pred_check_branch
      %57 = sbr.rel (0) target = $region29
    $region28: #{tpu_custom_call.1} parent=1 // pred_region
      %58 = dma.done [#allocation6], 12160
    $region29: #{tpu_custom_call.1} parent=1 // pred_fallthru
      _
    // Predicated region
    $region30: #{tpu_custom_call.1} parent=1 // pred_check
      _
    $region31: #{tpu_custom_call.1} parent=1 // pred_check_branch
      %60 = sbr.rel (0) target = $region33
    $region32: #{tpu_custom_call.1} parent=1 // pred_region
      %61 = dma.done [#allocation6], 4800
    $region33: #{tpu_custom_call.1} parent=1 // pred_fallthru
      _
    %v63 = vld [vmem:[#allocation2] sm:$0xff]
    %v64 = vld [vmem:[#allocation2 + $0x8] sm:$0xf]
    %v65 = vld [vmem:[#allocation2 + $0xc] sm:$0xff]
    %v66 = vld [vmem:[#allocation2 + $0x14] sm:$0xf]
    %v67 = vld [vmem:[#allocation5] sm:$0xff]
    %v68 = vld [vmem:[#allocation5 + $0x8] sm:$0xff]
    %v69 = vld [vmem:[#allocation5 + $0x10] sm:$0xf]
    %v70 = vld [vmem:[#allocation5 + $0x14] sm:$0xff]
    %v71 = vld [vmem:[#allocation5 + $0x1c] sm:$0xff]
    %v72 = vld [vmem:[#allocation5 + $0x24] sm:$0xf]
    %v73 = vld [vmem:[#allocation5 + $0x28] sm:$0xff]
    %v74 = vld [vmem:[#allocation5 + $0x30] sm:$0xff]
    %v75 = vld [vmem:[#allocation5 + $0x38] sm:$0xf]
    %v76 = vld [vmem:[#allocation5 + $0x3c] sm:$0xff]
    %v77 = vld [vmem:[#allocation5 + $0x44] sm:$0xff]
    %v78 = vld [vmem:[#allocation5 + $0x4c] sm:$0xf]
    %v79 = vld [vmem:[#allocation5 + $0x50] sm:$0xff]
    %v80 = vld [vmem:[#allocation5 + $0x58] sm:$0xff]
    %v81 = vld [vmem:[#allocation5 + $0x60] sm:$0xf]
    %v82 = vld [vmem:[#allocation5 + $0x64] sm:$0xff]
    %v83 = vld [vmem:[#allocation5 + $0x6c] sm:$0xff]
    %v84 = vld [vmem:[#allocation5 + $0x74] sm:$0xf]
    %v85 = vld [vmem:[#allocation5 + $0x78] sm:$0xff]
    %v86 = vld [vmem:[#allocation5 + $0x80] sm:$0xff]
    %v87 = vld [vmem:[#allocation5 + $0x88] sm:$0xf]
    %v88 = vld [vmem:[#allocation5 + $0x8c] sm:$0xff]
    %v89 = vld [vmem:[#allocation5 + $0x94] sm:$0xff]
    %v90 = vld [vmem:[#allocation5 + $0x9c] sm:$0xf]
    %v91 = vld [vmem:[#allocation5 + $0xa0] sm:$0xff]
    %v92 = vld [vmem:[#allocation5 + $0xa8] sm:$0xff]
    %v93 = vld [vmem:[#allocation5 + $0xb0] sm:$0xf]
    %v94 = vld [vmem:[#allocation5 + $0xb4] sm:$0xff]
    %v95 = vld [vmem:[#allocation5 + $0xbc] sm:$0xff]
    %v96 = vld [vmem:[#allocation5 + $0xc4] sm:$0xf]
    %v97 = vld [vmem:[#allocation5 + $0xc8] sm:$0xff]
    %v98 = vld [vmem:[#allocation5 + $0xd0] sm:$0xff]
    %v99 = vld [vmem:[#allocation5 + $0xd8] sm:$0xf]
    %v100 = vld [vmem:[#allocation5 + $0xdc] sm:$0xff]
    %v101 = vld [vmem:[#allocation5 + $0xe4] sm:$0xff]
    %v102 = vld [vmem:[#allocation5 + $0xec] sm:$0xf]
    %v103 = vld [vmem:[#allocation5 + $0xf0] sm:$0xff]
    %v104 = vld [vmem:[#allocation5 + $0xf8] sm:$0xff]
    %v105 = vld [vmem:[#allocation5 + $0x100] sm:$0xf]
    %v106 = vld [vmem:[#allocation5 + $0x104] sm:$0xff]
    %v107 = vld [vmem:[#allocation5 + $0x10c] sm:$0xff]
    %v108 = vld [vmem:[#allocation5 + $0x114] sm:$0xf]
    %v109 = vld [vmem:[#allocation5 + $0x118] sm:$0xff]
    %v110 = vld [vmem:[#allocation5 + $0x120] sm:$0xff]
    %v111 = vld [vmem:[#allocation5 + $0x128] sm:$0xf]
    %v112 = vld [vmem:[#allocation5 + $0x12c] sm:$0xff]
    %v113 = vld [vmem:[#allocation5 + $0x134] sm:$0xff]
    %v114 = vld [vmem:[#allocation5 + $0x13c] sm:$0xf]
    %v115 = vld [vmem:[#allocation5 + $0x140] sm:$0xff]
    %v116 = vld [vmem:[#allocation5 + $0x148] sm:$0xff]
    %v117 = vld [vmem:[#allocation5 + $0x150] sm:$0xf]
    %v118 = vld [vmem:[#allocation5 + $0x154] sm:$0xff]
    %v119 = vld [vmem:[#allocation5 + $0x15c] sm:$0xff]
    %v120 = vld [vmem:[#allocation5 + $0x164] sm:$0xf]
    %v121 = vld [vmem:[#allocation5 + $0x168] sm:$0xff]
    %v122 = vld [vmem:[#allocation5 + $0x170] sm:$0xff]
    %v123 = vld [vmem:[#allocation5 + $0x178] sm:$0xf]
    %v124 = vld [vmem:[#allocation5 + $0x17c] sm:$0xff]
    %v125 = vld [vmem:[#allocation5 + $0x184] sm:$0xff]
    %v126 = vld [vmem:[#allocation5 + $0x18c] sm:$0xf]
    %v127 = vld [vmem:[#allocation5 + $0x190] sm:$0xff]
    %v128 = vld [vmem:[#allocation5 + $0x198] sm:$0xff]
    %v129 = vld [vmem:[#allocation5 + $0x1a0] sm:$0xf]
    %v130 = vld [vmem:[#allocation5 + $0x1a4] sm:$0xff]
    %v131 = vld [vmem:[#allocation5 + $0x1ac] sm:$0xff]
    %v132 = vld [vmem:[#allocation5 + $0x1b4] sm:$0xf]
    %v133 = vld [vmem:[#allocation5 + $0x1b8] sm:$0xff]
    %v134 = vld [vmem:[#allocation5 + $0x1c0] sm:$0xff]
    %v135 = vld [vmem:[#allocation5 + $0x1c8] sm:$0xf]
    %v136 = vld [vmem:[#allocation5 + $0x1cc] sm:$0xff]
    %v137 = vld [vmem:[#allocation5 + $0x1d4] sm:$0xff]
    %v138 = vld [vmem:[#allocation5 + $0x1dc] sm:$0xf]
    %v139 = vld [vmem:[#allocation5 + $0x1e0] sm:$0xff]
    %v140 = vld [vmem:[#allocation5 + $0x1e8] sm:$0xff]
    %v141 = vld [vmem:[#allocation5 + $0x1f0] sm:$0xf]
    %v142 = vld [vmem:[#allocation5 + $0x1f4] sm:$0xff]
    %v143 = vld [vmem:[#allocation5 + $0x1fc] sm:$0xff]
    %v144 = vld [vmem:[#allocation5 + $0x204] sm:$0xf]
    %v145 = vld [vmem:[#allocation5 + $0x208] sm:$0xff]
    %v146 = vld [vmem:[#allocation5 + $0x210] sm:$0xff]
    %v147 = vld [vmem:[#allocation5 + $0x218] sm:$0xf]
    %v148 = vld [vmem:[#allocation5 + $0x21c] sm:$0xff]
    %v149 = vld [vmem:[#allocation5 + $0x224] sm:$0xff]
    %v150 = vld [vmem:[#allocation5 + $0x22c] sm:$0xf]
    %v151 = vld [vmem:[#allocation5 + $0x230] sm:$0xff]
    %v152 = vld [vmem:[#allocation5 + $0x238] sm:$0xff]
    %v153 = vld [vmem:[#allocation5 + $0x240] sm:$0xf]
    %v154 = vld [vmem:[#allocation5 + $0x244] sm:$0xff]
    %v155 = vld [vmem:[#allocation5 + $0x24c] sm:$0xff]
    %v156 = vld [vmem:[#allocation5 + $0x254] sm:$0xf]
    %v157 = vld [vmem:[#allocation5 + $0x258] sm:$0xff]
    %v158 = vld [vmem:[#allocation5 + $0x260] sm:$0xff]
    %v159 = vld [vmem:[#allocation5 + $0x268] sm:$0xf]
    %v160 = vld [vmem:[#allocation5 + $0x26c] sm:$0xff]
    %v161 = vld [vmem:[#allocation5 + $0x274] sm:$0xff]
    %v162 = vld [vmem:[#allocation5 + $0x27c] sm:$0xf]
    %v163 = vld [vmem:[#allocation5 + $0x280] sm:$0xff]
    %v164 = vld [vmem:[#allocation5 + $0x288] sm:$0xff]
    %v165 = vld [vmem:[#allocation5 + $0x290] sm:$0xf]
    %v166 = vld [vmem:[#allocation5 + $0x294] sm:$0xff]
    %v167 = vld [vmem:[#allocation5 + $0x29c] sm:$0xff]
    %v168 = vld [vmem:[#allocation5 + $0x2a4] sm:$0xf]
    %v169 = vld [vmem:[#allocation5 + $0x2a8] sm:$0xff]
    %v170 = vld [vmem:[#allocation5 + $0x2b0] sm:$0xff]
    %v171 = vld [vmem:[#allocation5 + $0x2b8] sm:$0xf]
    %v172 = vld [vmem:[#allocation5 + $0x2bc] sm:$0xff]
    %v173 = vld [vmem:[#allocation5 + $0x2c4] sm:$0xff]
    %v174 = vld [vmem:[#allocation5 + $0x2cc] sm:$0xf]
    %v175 = vld [vmem:[#allocation5 + $0x2d0] sm:$0xff]
    %v176 = vld [vmem:[#allocation5 + $0x2d8] sm:$0xff]
    %v177 = vld [vmem:[#allocation5 + $0x2e0] sm:$0xf]
    %v178 = vld [vmem:[#allocation5 + $0x2e4] sm:$0x33]
    %v179 = vld [vmem:[#allocation5 + $0x2ec] sm:$0x33]
    %v180 = vld [vmem:[#allocation5 + $0x2f4] sm:$0x3]
    %v181 = vld [vmem:[%s2] sm:$0x1f]
    %v183 = vlaneseq
    %v184 = vshrl.u32 %v183, 7
    %v185 = vsub.s32 0, %v184
    %v186 = vrot.slane %v181, %v185
    %v187 = vlaneseq
    %v188 = vshrl.u32 %v187, 7
    %v189 = vsub.s32 1, %v188
    %v190 = vrot.slane %v181, %v189
    %v191 = vlaneseq
    %v192 = vshrl.u32 %v191, 7
    %v193 = vsub.s32 2, %v192
    %v194 = vrot.slane %v181, %v193
    %v195 = vlaneseq
    %v196 = vshrl.u32 %v195, 7
    %v197 = vsub.s32 3, %v196
    %v198 = vrot.slane %v181, %v197
    %v199 = vlaneseq
    %v200 = vshrl.u32 %v199, 7
    %v201 = vsub.s32 4, %v200
    %v202 = vrot.slane %v181, %v201
    %v212 = vunpack.c.l.b16 %v63
    %v213 = vunpack.c.h.b16 %v63
    %v214 = vunpack.c.l.b16 %v64
    %v215 = vunpack.c.l.b16 %v65
    %v216 = vunpack.c.h.b16 %v65
    %v217 = vunpack.c.l.b16 %v66
    %v218 = vpack.c.b16 %v215, %v212
    %v219 = vpack.c.b16 %v216, %v213
    %v220 = vpack.c.b16 %v217, %v214
    %v337 = vunpack.c.l.b16 %v67
    %v338 = vunpack.c.h.b16 %v67
    %v339 = vunpack.c.l.b16 %v68
    %v340 = vunpack.c.h.b16 %v68
    %v341 = vunpack.c.l.b16 %v69
    %v342 = vunpack.c.l.b16 %v70
    %v343 = vunpack.c.h.b16 %v70
    %v344 = vunpack.c.l.b16 %v71
    %v345 = vunpack.c.h.b16 %v71
    %v346 = vunpack.c.l.b16 %v72
    %v347 = vunpack.c.l.b16 %v73
    %v348 = vunpack.c.h.b16 %v73
    %v349 = vunpack.c.l.b16 %v74
    %v350 = vunpack.c.h.b16 %v74
    %v351 = vunpack.c.l.b16 %v75
    %v352 = vunpack.c.l.b16 %v76
    %v353 = vunpack.c.h.b16 %v76
    %v354 = vunpack.c.l.b16 %v77
    %v355 = vunpack.c.h.b16 %v77
    %v356 = vunpack.c.l.b16 %v78
    %v357 = vunpack.c.l.b16 %v79
    %v358 = vunpack.c.h.b16 %v79
    %v359 = vunpack.c.l.b16 %v80
    %v360 = vunpack.c.h.b16 %v80
    %v361 = vunpack.c.l.b16 %v81
    %v362 = vunpack.c.l.b16 %v82
    %v363 = vunpack.c.h.b16 %v82
    %v364 = vunpack.c.l.b16 %v83
    %v365 = vunpack.c.h.b16 %v83
    %v366 = vunpack.c.l.b16 %v84
    %v367 = vunpack.c.l.b16 %v85
    %v368 = vunpack.c.h.b16 %v85
    %v369 = vunpack.c.l.b16 %v86
    %v370 = vunpack.c.h.b16 %v86
    %v371 = vunpack.c.l.b16 %v87
    %v372 = vunpack.c.l.b16 %v88
    %v373 = vunpack.c.h.b16 %v88
    %v374 = vunpack.c.l.b16 %v89
    %v375 = vunpack.c.h.b16 %v89
    %v376 = vunpack.c.l.b16 %v90
    %v377 = vunpack.c.l.b16 %v91
    %v378 = vunpack.c.h.b16 %v91
    %v379 = vunpack.c.l.b16 %v92
    %v380 = vunpack.c.h.b16 %v92
    %v381 = vunpack.c.l.b16 %v93
    %v382 = vunpack.c.l.b16 %v94
    %v383 = vunpack.c.h.b16 %v94
    %v384 = vunpack.c.l.b16 %v95
    %v385 = vunpack.c.h.b16 %v95
    %v386 = vunpack.c.l.b16 %v96
    %v387 = vunpack.c.l.b16 %v97
    %v388 = vunpack.c.h.b16 %v97
    %v389 = vunpack.c.l.b16 %v98
    %v390 = vunpack.c.h.b16 %v98
    %v391 = vunpack.c.l.b16 %v99
    %v392 = vunpack.c.l.b16 %v100
    %v393 = vunpack.c.h.b16 %v100
    %v394 = vunpack.c.l.b16 %v101
    %v395 = vunpack.c.h.b16 %v101
    %v396 = vunpack.c.l.b16 %v102
    %v397 = vunpack.c.l.b16 %v103
    %v398 = vunpack.c.h.b16 %v103
    %v399 = vunpack.c.l.b16 %v104
    %v400 = vunpack.c.h.b16 %v104
    %v401 = vunpack.c.l.b16 %v105
    %v402 = vunpack.c.l.b16 %v106
    %v403 = vunpack.c.h.b16 %v106
    %v404 = vunpack.c.l.b16 %v107
    %v405 = vunpack.c.h.b16 %v107
    %v406 = vunpack.c.l.b16 %v108
    %v407 = vunpack.c.l.b16 %v109
    %v408 = vunpack.c.h.b16 %v109
    %v409 = vunpack.c.l.b16 %v110
    %v410 = vunpack.c.h.b16 %v110
    %v411 = vunpack.c.l.b16 %v111
    %v412 = vunpack.c.l.b16 %v112
    %v413 = vunpack.c.h.b16 %v112
    %v414 = vunpack.c.l.b16 %v113
    %v415 = vunpack.c.h.b16 %v113
    %v416 = vunpack.c.l.b16 %v114
    %v417 = vunpack.c.l.b16 %v115
    %v418 = vunpack.c.h.b16 %v115
    %v419 = vunpack.c.l.b16 %v116
    %v420 = vunpack.c.h.b16 %v116
    %v421 = vunpack.c.l.b16 %v117
    %v422 = vunpack.c.l.b16 %v118
    %v423 = vunpack.c.h.b16 %v118
    %v424 = vunpack.c.l.b16 %v119
    %v425 = vunpack.c.h.b16 %v119
    %v426 = vunpack.c.l.b16 %v120
    %v427 = vunpack.c.l.b16 %v121
    %v428 = vunpack.c.h.b16 %v121
    %v429 = vunpack.c.l.b16 %v122
    %v430 = vunpack.c.h.b16 %v122
    %v431 = vunpack.c.l.b16 %v123
    %v432 = vunpack.c.l.b16 %v124
    %v433 = vunpack.c.h.b16 %v124
    %v434 = vunpack.c.l.b16 %v125
    %v435 = vunpack.c.h.b16 %v125
    %v436 = vunpack.c.l.b16 %v126
    %v437 = vunpack.c.l.b16 %v127
    %v438 = vunpack.c.h.b16 %v127
    %v439 = vunpack.c.l.b16 %v128
    %v440 = vunpack.c.h.b16 %v128
    %v441 = vunpack.c.l.b16 %v129
    %v442 = vunpack.c.l.b16 %v130
    %v443 = vunpack.c.h.b16 %v130
    %v444 = vunpack.c.l.b16 %v131
    %v445 = vunpack.c.h.b16 %v131
    %v446 = vunpack.c.l.b16 %v132
    %v447 = vunpack.c.l.b16 %v133
    %v448 = vunpack.c.h.b16 %v133
    %v449 = vunpack.c.l.b16 %v134
    %v450 = vunpack.c.h.b16 %v134
    %v451 = vunpack.c.l.b16 %v135
    %v452 = vunpack.c.l.b16 %v136
    %v453 = vunpack.c.h.b16 %v136
    %v454 = vunpack.c.l.b16 %v137
    %v455 = vunpack.c.h.b16 %v137
    %v456 = vunpack.c.l.b16 %v138
    %v457 = vunpack.c.l.b16 %v139
    %v458 = vunpack.c.h.b16 %v139
    %v459 = vunpack.c.l.b16 %v140
    %v460 = vunpack.c.h.b16 %v140
    %v461 = vunpack.c.l.b16 %v141
    %v462 = vunpack.c.l.b16 %v142
    %v463 = vunpack.c.h.b16 %v142
    %v464 = vunpack.c.l.b16 %v143
    %v465 = vunpack.c.h.b16 %v143
    %v466 = vunpack.c.l.b16 %v144
    %v467 = vunpack.c.l.b16 %v145
    %v468 = vunpack.c.h.b16 %v145
    %v469 = vunpack.c.l.b16 %v146
    %v470 = vunpack.c.h.b16 %v146
    %v471 = vunpack.c.l.b16 %v147
    %v472 = vunpack.c.l.b16 %v148
    %v473 = vunpack.c.h.b16 %v148
    %v474 = vunpack.c.l.b16 %v149
    %v475 = vunpack.c.h.b16 %v149
    %v476 = vunpack.c.l.b16 %v150
    %v477 = vunpack.c.l.b16 %v151
    %v478 = vunpack.c.h.b16 %v151
    %v479 = vunpack.c.l.b16 %v152
    %v480 = vunpack.c.h.b16 %v152
    %v481 = vunpack.c.l.b16 %v153
    %v482 = vunpack.c.l.b16 %v154
    %v483 = vunpack.c.h.b16 %v154
    %v484 = vunpack.c.l.b16 %v155
    %v485 = vunpack.c.h.b16 %v155
    %v486 = vunpack.c.l.b16 %v156
    %v487 = vunpack.c.l.b16 %v157
    %v488 = vunpack.c.h.b16 %v157
    %v489 = vunpack.c.l.b16 %v158
    %v490 = vunpack.c.h.b16 %v158
    %v491 = vunpack.c.l.b16 %v159
    %v492 = vunpack.c.l.b16 %v160
    %v493 = vunpack.c.h.b16 %v160
    %v494 = vunpack.c.l.b16 %v161
    %v495 = vunpack.c.h.b16 %v161
    %v496 = vunpack.c.l.b16 %v162
    %v497 = vunpack.c.l.b16 %v163
    %v498 = vunpack.c.h.b16 %v163
    %v499 = vunpack.c.l.b16 %v164
    %v500 = vunpack.c.h.b16 %v164
    %v501 = vunpack.c.l.b16 %v165
    %v502 = vunpack.c.l.b16 %v166
    %v503 = vunpack.c.h.b16 %v166
    %v504 = vunpack.c.l.b16 %v167
    %v505 = vunpack.c.h.b16 %v167
    %v506 = vunpack.c.l.b16 %v168
    %v507 = vunpack.c.l.b16 %v169
    %v508 = vunpack.c.h.b16 %v169
    %v509 = vunpack.c.l.b16 %v170
    %v510 = vunpack.c.h.b16 %v170
    %v511 = vunpack.c.l.b16 %v171
    %v512 = vunpack.c.l.b16 %v172
    %v513 = vunpack.c.h.b16 %v172
    %v514 = vunpack.c.l.b16 %v173
    %v515 = vunpack.c.h.b16 %v173
    %v516 = vunpack.c.l.b16 %v174
    %v517 = vunpack.c.l.b16 %v175
    %v518 = vunpack.c.h.b16 %v175
    %v519 = vunpack.c.l.b16 %v176
    %v520 = vunpack.c.h.b16 %v176
    %v521 = vunpack.c.l.b16 %v177
    %v522 = vunpack.c.l.b16 %v178
    %v523 = vunpack.c.h.b16 %v178
    %v524 = vunpack.c.l.b16 %v179
    %v525 = vunpack.c.h.b16 %v179
    %v526 = vunpack.c.l.b16 %v180
    %v527 = vpack.c.b16 %v342, %v337
    %v528 = vpack.c.b16 %v343, %v338
    %v529 = vpack.c.b16 %v344, %v339
    %v530 = vpack.c.b16 %v345, %v340
    %v531 = vpack.c.b16 %v346, %v341
    %v532 = vpack.c.b16 %v352, %v347
    %v533 = vpack.c.b16 %v353, %v348
    %v534 = vpack.c.b16 %v354, %v349
    %v535 = vpack.c.b16 %v355, %v350
    %v536 = vpack.c.b16 %v356, %v351
    %v537 = vpack.c.b16 %v362, %v357
    %v538 = vpack.c.b16 %v363, %v358
    %v539 = vpack.c.b16 %v364, %v359
    %v540 = vpack.c.b16 %v365, %v360
    %v541 = vpack.c.b16 %v366, %v361
    %v542 = vpack.c.b16 %v372, %v367
    %v543 = vpack.c.b16 %v373, %v368
    %v544 = vpack.c.b16 %v374, %v369
    %v545 = vpack.c.b16 %v375, %v370
    %v546 = vpack.c.b16 %v376, %v371
    %v547 = vpack.c.b16 %v382, %v377
    %v548 = vpack.c.b16 %v383, %v378
    %v549 = vpack.c.b16 %v384, %v379
    %v550 = vpack.c.b16 %v385, %v380
    %v551 = vpack.c.b16 %v386, %v381
    %v552 = vpack.c.b16 %v392, %v387
    %v553 = vpack.c.b16 %v393, %v388
    %v554 = vpack.c.b16 %v394, %v389
    %v555 = vpack.c.b16 %v395, %v390
    %v556 = vpack.c.b16 %v396, %v391
    %v557 = vpack.c.b16 %v402, %v397
    %v558 = vpack.c.b16 %v403, %v398
    %v559 = vpack.c.b16 %v404, %v399
    %v560 = vpack.c.b16 %v405, %v400
    %v561 = vpack.c.b16 %v406, %v401
    %v562 = vpack.c.b16 %v412, %v407
    %v563 = vpack.c.b16 %v413, %v408
    %v564 = vpack.c.b16 %v414, %v409
    %v565 = vpack.c.b16 %v415, %v410
    %v566 = vpack.c.b16 %v416, %v411
    %v567 = vpack.c.b16 %v422, %v417
    %v568 = vpack.c.b16 %v423, %v418
    %v569 = vpack.c.b16 %v424, %v419
    %v570 = vpack.c.b16 %v425, %v420
    %v571 = vpack.c.b16 %v426, %v421
    %v572 = vpack.c.b16 %v432, %v427
    %v573 = vpack.c.b16 %v433, %v428
    %v574 = vpack.c.b16 %v434, %v429
    %v575 = vpack.c.b16 %v435, %v430
    %v576 = vpack.c.b16 %v436, %v431
    %v577 = vpack.c.b16 %v442, %v437
    %v578 = vpack.c.b16 %v443, %v438
    %v579 = vpack.c.b16 %v444, %v439
    %v580 = vpack.c.b16 %v445, %v440
    %v581 = vpack.c.b16 %v446, %v441
    %v582 = vpack.c.b16 %v452, %v447
    %v583 = vpack.c.b16 %v453, %v448
    %v584 = vpack.c.b16 %v454, %v449
    %v585 = vpack.c.b16 %v455, %v450
    %v586 = vpack.c.b16 %v456, %v451
    %v587 = vpack.c.b16 %v462, %v457
    %v588 = vpack.c.b16 %v463, %v458
    %v589 = vpack.c.b16 %v464, %v459
    %v590 = vpack.c.b16 %v465, %v460
    %v591 = vpack.c.b16 %v466, %v461
    %v592 = vpack.c.b16 %v472, %v467
    %v593 = vpack.c.b16 %v473, %v468
    %v594 = vpack.c.b16 %v474, %v469
    %v595 = vpack.c.b16 %v475, %v470
    %v596 = vpack.c.b16 %v476, %v471
    %v597 = vpack.c.b16 %v482, %v477
    %v598 = vpack.c.b16 %v483, %v478
    %v599 = vpack.c.b16 %v484, %v479
    %v600 = vpack.c.b16 %v485, %v480
    %v601 = vpack.c.b16 %v486, %v481
    %v602 = vpack.c.b16 %v492, %v487
    %v603 = vpack.c.b16 %v493, %v488
    %v604 = vpack.c.b16 %v494, %v489
    %v605 = vpack.c.b16 %v495, %v490
    %v606 = vpack.c.b16 %v496, %v491
    %v607 = vpack.c.b16 %v502, %v497
    %v608 = vpack.c.b16 %v503, %v498
    %v609 = vpack.c.b16 %v504, %v499
    %v610 = vpack.c.b16 %v505, %v500
    %v611 = vpack.c.b16 %v506, %v501
    %v612 = vpack.c.b16 %v512, %v507
    %v613 = vpack.c.b16 %v513, %v508
    %v614 = vpack.c.b16 %v514, %v509
    %v615 = vpack.c.b16 %v515, %v510
    %v616 = vpack.c.b16 %v516, %v511
    %v617 = vpack.c.b16 %v522, %v517
    %v618 = vpack.c.b16 %v523, %v518
    %v619 = vpack.c.b16 %v524, %v519
    %v620 = vpack.c.b16 %v525, %v520
    %v621 = vpack.c.b16 %v526, %v521
    %vm712 = vcmask 359424
    %v714 = vsel %vm712, %v220, 0
    %vm716 = vcmask 1045504
    %v718 = vsel %vm716, %v617, 0
    %v721 = vsel %vm716, %v618, 0
    %v724 = vsel %vm716, %v619, 0
    %v727 = vsel %vm716, %v620, 0
    %v730 = vsel %vm716, %v621, 0
    %732 = vmatprep.subr.bf16.mxu0 %v528
    %733 = vmatpush1.bf16.msra.mxu0 %v527
    %734 = vmatprep.subr.bf16.mxu0 %v533
    %735 = vmatpush1.bf16.msra.mxu0 %v532
    %736 = vmatprep.subr.bf16.mxu0 %v538
    %737 = vmatpush1.bf16.msra.mxu0 %v537
    %738 = vmatprep.subr.bf16.mxu0 %v543
    %739 = vmatpush1.bf16.msra.mxu0 %v542
    %740 = vmatprep.subr.bf16.mxu0 %v548
    %741 = vmatpush1.bf16.msra.mxu0 %v547
    %742 = vmatprep.subr.bf16.mxu0 %v553
    %743 = vmatpush1.bf16.msra.mxu0 %v552
    %744 = vmatprep.subr.bf16.mxu0 %v558
    %745 = vmatpush1.bf16.msra.mxu0 %v557
    %746 = vmatprep.subr.bf16.mxu0 %v563
    %747 = vmatpush1.bf16.msra.mxu0 %v562
    %748 = vmatprep.subr.bf16.mxu0 %v568
    %749 = vmatpush1.bf16.msra.mxu0 %v567
    %750 = vmatprep.subr.bf16.mxu0 %v573
    %751 = vmatpush1.bf16.msra.mxu0 %v572
    %752 = vmatprep.subr.bf16.mxu0 %v578
    %753 = vmatpush1.bf16.msra.mxu0 %v577
    %754 = vmatprep.subr.bf16.mxu0 %v583
    %755 = vmatpush1.bf16.msra.mxu0 %v582
    %756 = vmatprep.subr.bf16.mxu0 %v588
    %757 = vmatpush1.bf16.msra.mxu0 %v587
    %758 = vmatprep.subr.bf16.mxu0 %v593
    %759 = vmatpush1.bf16.msra.mxu0 %v592
    %760 = vmatprep.subr.bf16.mxu0 %v598
    %761 = vmatpush1.bf16.msra.mxu0 %v597
    %762 = vmatprep.subr.bf16.mxu0 %v603
    %763 = vmatpush1.bf16.msra.mxu0 %v602
    %764 = vmatprep.mubr.bf16.mxu0 %v219
    %765 = vmatmul.mubr.bf16.gmra.mrb[0].mxu0 %v218
    %v766 = vpop.f32.mrb[0].mxu0
    %v767 = vadd.f32 %v186, %v766
    %v768 = vpop.f32.mrb[0].mxu0
    %v769 = vadd.f32 %v190, %v768
    %v770 = vpop.f32.mrb[0].mxu0
    %v771 = vadd.f32 %v186, %v770
    %v772 = vpop.f32.mrb[0].mxu0
    %v773 = vadd.f32 %v190, %v772
    %774 = vdwg.mxu0
    %775 = vmatprep.subr.bf16.mxu0 %v608
    %776 = vmatpush1.bf16.msra.mxu0 %v607
    %777 = vmatprep.subr.bf16.mxu0 %v613
    %778 = vmatpush1.bf16.msra.mxu0 %v612
    %779 = vmatprep.subr.bf16.mxu0 %v721
    %780 = vmatpush1.bf16.msra.mxu0 %v718
    %781 = vmatprep.subr.bf16.mxu0 0
    %782 = vmatpush1.bf16.msra.mxu0 0
    %783 = vmatprep.subr.bf16.mxu0 0
    %784 = vmatpush1.bf16.msra.mxu0 0
    %785 = vmatprep.subr.bf16.mxu0 0
    %786 = vmatpush1.bf16.msra.mxu0 0
    %787 = vmatprep.subr.bf16.mxu0 0
    %788 = vmatpush1.bf16.msra.mxu0 0
    %789 = vmatprep.subr.bf16.mxu0 0
    %790 = vmatpush1.bf16.msra.mxu0 0
    %791 = vmatprep.subr.bf16.mxu0 0
    %792 = vmatpush1.bf16.msra.mxu0 0
    %793 = vmatprep.subr.bf16.mxu0 0
    %794 = vmatpush1.bf16.msra.mxu0 0
    %795 = vmatprep.subr.bf16.mxu0 0
    %796 = vmatpush1.bf16.msra.mxu0 0
    %797 = vmatprep.subr.bf16.mxu0 0
    %798 = vmatpush1.bf16.msra.mxu0 0
    %799 = vmatprep.subr.bf16.mxu0 0
    %800 = vmatpush1.bf16.msra.mxu0 0
    %801 = vmatprep.subr.bf16.mxu0 0
    %802 = vmatpush1.bf16.msra.mxu0 0
    %803 = vmatprep.subr.bf16.mxu0 0
    %804 = vmatpush1.bf16.msra.mxu0 0
    %805 = vmatprep.subr.bf16.mxu0 0
    %806 = vmatpush1.bf16.msra.mxu0 0
    %807 = vmatprep.mubr.bf16.mxu0 0
    %808 = vmatmul.mubr.bf16.gmra.mrb[0].mxu0 %v714
    %v809 = vpop.f32.mrb[0].mxu0
    %v810 = vadd.f32 %v767, %v809
    %v811 = vpop.f32.mrb[0].mxu0
    %v812 = vadd.f32 %v769, %v811
    %v813 = vpop.f32.mrb[0].mxu0
    %v814 = vadd.f32 %v771, %v813
    %v815 = vpop.f32.mrb[0].mxu0
    %v816 = vadd.f32 %v773, %v815
    %817 = vdwg.mxu0
    %818 = vmatprep.subr.bf16.mxu0 %v530
    %819 = vmatpush1.bf16.msra.mxu0 %v529
    %820 = vmatprep.subr.bf16.mxu0 %v535
    %821 = vmatpush1.bf16.msra.mxu0 %v534
    %822 = vmatprep.subr.bf16.mxu0 %v540
    %823 = vmatpush1.bf16.msra.mxu0 %v539
    %824 = vmatprep.subr.bf16.mxu0 %v545
    %825 = vmatpush1.bf16.msra.mxu0 %v544
    %826 = vmatprep.subr.bf16.mxu0 %v550
    %827 = vmatpush1.bf16.msra.mxu0 %v549
    %828 = vmatprep.subr.bf16.mxu0 %v555
    %829 = vmatpush1.bf16.msra.mxu0 %v554
    %830 = vmatprep.subr.bf16.mxu0 %v560
    %831 = vmatpush1.bf16.msra.mxu0 %v559
    %832 = vmatprep.subr.bf16.mxu0 %v565
    %833 = vmatpush1.bf16.msra.mxu0 %v564
    %834 = vmatprep.subr.bf16.mxu0 %v570
    %835 = vmatpush1.bf16.msra.mxu0 %v569
    %836 = vmatprep.subr.bf16.mxu0 %v575
    %837 = vmatpush1.bf16.msra.mxu0 %v574
    %838 = vmatprep.subr.bf16.mxu0 %v580
    %839 = vmatpush1.bf16.msra.mxu0 %v579
    %840 = vmatprep.subr.bf16.mxu0 %v585
    %841 = vmatpush1.bf16.msra.mxu0 %v584
    %842 = vmatprep.subr.bf16.mxu0 %v590
    %843 = vmatpush1.bf16.msra.mxu0 %v589
    %844 = vmatprep.subr.bf16.mxu0 %v595
    %845 = vmatpush1.bf16.msra.mxu0 %v594
    %846 = vmatprep.subr.bf16.mxu0 %v600
    %847 = vmatpush1.bf16.msra.mxu0 %v599
    %848 = vmatprep.subr.bf16.mxu0 %v605
    %849 = vmatpush1.bf16.msra.mxu0 %v604
    %850 = vmatprep.mubr.bf16.mxu0 %v219
    %851 = vmatmul.mubr.bf16.gmra.mrb[0].mxu0 %v218
    %v852 = vpop.f32.mrb[0].mxu0
    %v853 = vadd.f32 %v194, %v852
    %v854 = vpop.f32.mrb[0].mxu0
    %v855 = vadd.f32 %v198, %v854
    %v856 = vpop.f32.mrb[0].mxu0
    %v857 = vadd.f32 %v194, %v856
    %v858 = vpop.f32.mrb[0].mxu0
    %v859 = vadd.f32 %v198, %v858
    %860 = vdwg.mxu0
    %861 = vmatprep.subr.bf16.mxu0 %v610
    %862 = vmatpush1.bf16.msra.mxu0 %v609
    %863 = vmatprep.subr.bf16.mxu0 %v615
    %864 = vmatpush1.bf16.msra.mxu0 %v614
    %865 = vmatprep.subr.bf16.mxu0 %v727
    %866 = vmatpush1.bf16.msra.mxu0 %v724
    %867 = vmatprep.subr.bf16.mxu0 0
    %868 = vmatpush1.bf16.msra.mxu0 0
    %869 = vmatprep.subr.bf16.mxu0 0
    %870 = vmatpush1.bf16.msra.mxu0 0
    %871 = vmatprep.subr.bf16.mxu0 0
    %872 = vmatpush1.bf16.msra.mxu0 0
    %873 = vmatprep.subr.bf16.mxu0 0
    %874 = vmatpush1.bf16.msra.mxu0 0
    %875 = vmatprep.subr.bf16.mxu0 0
    %876 = vmatpush1.bf16.msra.mxu0 0
    %877 = vmatprep.subr.bf16.mxu0 0
    %878 = vmatpush1.bf16.msra.mxu0 0
    %879 = vmatprep.subr.bf16.mxu0 0
    %880 = vmatpush1.bf16.msra.mxu0 0
    %881 = vmatprep.subr.bf16.mxu0 0
    %882 = vmatpush1.bf16.msra.mxu0 0
    %883 = vmatprep.subr.bf16.mxu0 0
    %884 = vmatpush1.bf16.msra.mxu0 0
    %885 = vmatprep.subr.bf16.mxu0 0
    %886 = vmatpush1.bf16.msra.mxu0 0
    %887 = vmatprep.subr.bf16.mxu0 0
    %888 = vmatpush1.bf16.msra.mxu0 0
    %889 = vmatprep.subr.bf16.mxu0 0
    %890 = vmatpush1.bf16.msra.mxu0 0
    %891 = vmatprep.subr.bf16.mxu0 0
    %892 = vmatpush1.bf16.msra.mxu0 0
    %893 = vmatprep.mubr.bf16.mxu0 0
    %894 = vmatmul.mubr.bf16.gmra.mrb[0].mxu0 %v714
    %v895 = vpop.f32.mrb[0].mxu0
    %v896 = vadd.f32 %v853, %v895
    %v897 = vpop.f32.mrb[0].mxu0
    %v898 = vadd.f32 %v855, %v897
    %v899 = vpop.f32.mrb[0].mxu0
    %v900 = vadd.f32 %v857, %v899
    %v901 = vpop.f32.mrb[0].mxu0
    %v902 = vadd.f32 %v859, %v901
    %903 = vdwg.mxu0
    %904 = vmatprep.subr.bf16.mxu0 0
    %905 = vmatpush1.bf16.msra.mxu0 %v531
    %906 = vmatprep.subr.bf16.mxu0 0
    %907 = vmatpush1.bf16.msra.mxu0 %v536
    %908 = vmatprep.subr.bf16.mxu0 0
    %909 = vmatpush1.bf16.msra.mxu0 %v541
    %910 = vmatprep.subr.bf16.mxu0 0
    %911 = vmatpush1.bf16.msra.mxu0 %v546
    %912 = vmatprep.subr.bf16.mxu0 0
    %913 = vmatpush1.bf16.msra.mxu0 %v551
    %914 = vmatprep.subr.bf16.mxu0 0
    %915 = vmatpush1.bf16.msra.mxu0 %v556
    %916 = vmatprep.subr.bf16.mxu0 0
    %917 = vmatpush1.bf16.msra.mxu0 %v561
    %918 = vmatprep.subr.bf16.mxu0 0
    %919 = vmatpush1.bf16.msra.mxu0 %v566
    %920 = vmatprep.subr.bf16.mxu0 0
    %921 = vmatpush1.bf16.msra.mxu0 %v571
    %922 = vmatprep.subr.bf16.mxu0 0
    %923 = vmatpush1.bf16.msra.mxu0 %v576
    %924 = vmatprep.subr.bf16.mxu0 0
    %925 = vmatpush1.bf16.msra.mxu0 %v581
    %926 = vmatprep.subr.bf16.mxu0 0
    %927 = vmatpush1.bf16.msra.mxu0 %v586
    %928 = vmatprep.subr.bf16.mxu0 0
    %929 = vmatpush1.bf16.msra.mxu0 %v591
    %930 = vmatprep.subr.bf16.mxu0 0
    %931 = vmatpush1.bf16.msra.mxu0 %v596
    %932 = vmatprep.subr.bf16.mxu0 0
    %933 = vmatpush1.bf16.msra.mxu0 %v601
    %934 = vmatprep.subr.bf16.mxu0 0
    %935 = vmatpush1.bf16.msra.mxu0 %v606
    %936 = vmatprep.mubr.bf16.mxu0 %v219
    %937 = vmatmul.mubr.bf16.gmra.mrb[0].mxu0 %v218
    %v938 = vpop.f32.mrb[0].mxu0
    %v939 = vadd.f32 %v202, %v938
    %v940 = vpop.f32.mrb[0].mxu0
    %v941 = vpop.f32.mrb[0].mxu0
    %v942 = vadd.f32 %v202, %v941
    %v943 = vpop.f32.mrb[0].mxu0
    %944 = vdwg.mxu0
    %945 = vmatprep.subr.bf16.mxu0 0
    %946 = vmatpush1.bf16.msra.mxu0 %v611
    %947 = vmatprep.subr.bf16.mxu0 0
    %948 = vmatpush1.bf16.msra.mxu0 %v616
    %949 = vmatprep.subr.bf16.mxu0 0
    %950 = vmatpush1.bf16.msra.mxu0 %v730
    %951 = vmatprep.subr.bf16.mxu0 0
    %952 = vmatpush1.bf16.msra.mxu0 0
    %953 = vmatprep.subr.bf16.mxu0 0
    %954 = vmatpush1.bf16.msra.mxu0 0
    %955 = vmatprep.subr.bf16.mxu0 0
    %956 = vmatpush1.bf16.msra.mxu0 0
    %957 = vmatprep.subr.bf16.mxu0 0
    %958 = vmatpush1.bf16.msra.mxu0 0
    %959 = vmatprep.subr.bf16.mxu0 0
    %960 = vmatpush1.bf16.msra.mxu0 0
    %961 = vmatprep.subr.bf16.mxu0 0
    %962 = vmatpush1.bf16.msra.mxu0 0
    %963 = vmatprep.subr.bf16.mxu0 0
    %964 = vmatpush1.bf16.msra.mxu0 0
    %965 = vmatprep.subr.bf16.mxu0 0
    %966 = vmatpush1.bf16.msra.mxu0 0
    %967 = vmatprep.subr.bf16.mxu0 0
    %968 = vmatpush1.bf16.msra.mxu0 0
    %969 = vmatprep.subr.bf16.mxu0 0
    %970 = vmatpush1.bf16.msra.mxu0 0
    %971 = vmatprep.subr.bf16.mxu0 0
    %972 = vmatpush1.bf16.msra.mxu0 0
    %973 = vmatprep.subr.bf16.mxu0 0
    %974 = vmatpush1.bf16.msra.mxu0 0
    %975 = vmatprep.subr.bf16.mxu0 0
    %976 = vmatpush1.bf16.msra.mxu0 0
    %977 = vmatprep.mubr.bf16.mxu0 0
    %978 = vmatmul.mubr.bf16.gmra.mrb[0].mxu0 %v714
    %v979 = vpop.f32.mrb[0].mxu0
    %v980 = vadd.f32 %v939, %v979
    %v981 = vpop.f32.mrb[0].mxu0
    %v982 = vpop.f32.mrb[0].mxu0
    %v983 = vadd.f32 %v942, %v982
    %v984 = vpop.f32.mrb[0].mxu0
    %985 = vdwg.mxu0
    %v986 = vtanh.pop %v810
    %v987 = vtanh.pop %v812
    %v988 = vtanh.pop %v896
    %v989 = vtanh.pop %v898
    %v990 = vtanh.pop %v980
    %v991 = vtanh.pop %v814
    %v992 = vtanh.pop %v816
    %v993 = vtanh.pop %v900
    %v994 = vtanh.pop %v902
    %v995 = vtanh.pop %v983
    %v996 = vpack.c.bf16 %v991, %v986
    %v997 = vpack.c.bf16 %v992, %v987
    %v998 = vpack.c.bf16 %v993, %v988
    %v999 = vpack.c.bf16 %v994, %v989
    %v1000 = vpack.c.bf16 %v995, %v990
    %v1001 = vld [vmem:[#allocation7] sm:$0xf]
    %v1002 = vld [vmem:[#allocation7 + $0x4] sm:$0xf]
    %v1003 = vld [vmem:[#allocation7 + $0x8] sm:$0xf]
    %v1004 = vld [vmem:[#allocation7 + $0xc] sm:$0xf]
    %v1005 = vld [vmem:[#allocation7 + $0x10] sm:$0xf]
    %v1006 = vld [vmem:[#allocation7 + $0x14] sm:$0xf]
    %v1007 = vld [vmem:[#allocation7 + $0x18] sm:$0xf]
    %v1008 = vld [vmem:[#allocation7 + $0x1c] sm:$0xf]
    %v1009 = vld [vmem:[#allocation7 + $0x20] sm:$0xf]
    %v1010 = vld [vmem:[#allocation7 + $0x24] sm:$0xf]
    %v1011 = vld [vmem:[#allocation7 + $0x28] sm:$0xf]
    %v1012 = vld [vmem:[#allocation7 + $0x2c] sm:$0xf]
    %v1013 = vld [vmem:[#allocation7 + $0x30] sm:$0xf]
    %v1014 = vld [vmem:[#allocation7 + $0x34] sm:$0xf]
    %v1015 = vld [vmem:[#allocation7 + $0x38] sm:$0xf]
    %v1016 = vld [vmem:[#allocation7 + $0x3c] sm:$0xf]
    %v1017 = vld [vmem:[#allocation7 + $0x40] sm:$0xf]
    %v1018 = vld [vmem:[#allocation7 + $0x44] sm:$0xf]
    %v1019 = vld [vmem:[#allocation7 + $0x48] sm:$0xf]
    %v1020 = vld [vmem:[#allocation7 + $0x4c] sm:$0xf]
    %v1021 = vld [vmem:[#allocation7 + $0x50] sm:$0xf]
    %v1022 = vld [vmem:[#allocation7 + $0x54] sm:$0xf]
    %v1023 = vld [vmem:[#allocation7 + $0x58] sm:$0xf]
    %v1024 = vld [vmem:[#allocation7 + $0x5c] sm:$0xf]
    %v1025 = vld [vmem:[#allocation7 + $0x60] sm:$0xf]
    %v1026 = vld [vmem:[#allocation7 + $0x64] sm:$0xf]
    %v1027 = vld [vmem:[#allocation7 + $0x68] sm:$0xf]
    %v1028 = vld [vmem:[#allocation7 + $0x6c] sm:$0xf]
    %v1029 = vld [vmem:[#allocation7 + $0x70] sm:$0xf]
    %v1030 = vld [vmem:[#allocation7 + $0x74] sm:$0xf]
    %v1031 = vld [vmem:[#allocation7 + $0x78] sm:$0xf]
    %v1032 = vld [vmem:[#allocation7 + $0x7c] sm:$0xf]
    %v1033 = vld [vmem:[#allocation7 + $0x80] sm:$0xf]
    %v1034 = vld [vmem:[#allocation7 + $0x84] sm:$0xf]
    %v1035 = vld [vmem:[#allocation7 + $0x88] sm:$0xf]
    %v1036 = vld [vmem:[#allocation7 + $0x8c] sm:$0xf]
    %v1037 = vld [vmem:[#allocation7 + $0x90] sm:$0xf]
    %v1038 = vld [vmem:[#allocation7 + $0x94] sm:$0xf]
    %v1039 = vld [vmem:[#allocation7 + $0x98] sm:$0xf]
    %v1040 = vld [vmem:[#allocation7 + $0x9c] sm:$0xf]
    %v1041 = vld [vmem:[#allocation7 + $0xa0] sm:$0xf]
    %v1042 = vld [vmem:[#allocation7 + $0xa4] sm:$0xf]
    %v1043 = vld [vmem:[#allocation7 + $0xa8] sm:$0xf]
    %v1044 = vld [vmem:[#allocation7 + $0xac] sm:$0xf]
    %v1045 = vld [vmem:[#allocation7 + $0xb0] sm:$0xf]
    %v1046 = vld [vmem:[#allocation7 + $0xb4] sm:$0xf]
    %v1047 = vld [vmem:[#allocation7 + $0xb8] sm:$0xf]
    %v1048 = vld [vmem:[#allocation7 + $0xbc] sm:$0xf]
    %v1049 = vld [vmem:[#allocation7 + $0xc0] sm:$0xf]
    %v1050 = vld [vmem:[#allocation7 + $0xc4] sm:$0xf]
    %v1051 = vld [vmem:[#allocation7 + $0xc8] sm:$0xf]
    %v1052 = vld [vmem:[#allocation7 + $0xcc] sm:$0xf]
    %v1053 = vld [vmem:[#allocation7 + $0xd0] sm:$0xf]
    %v1054 = vld [vmem:[#allocation7 + $0xd4] sm:$0xf]
    %v1055 = vld [vmem:[#allocation7 + $0xd8] sm:$0xf]
    %v1056 = vld [vmem:[#allocation7 + $0xdc] sm:$0xf]
    %v1057 = vld [vmem:[#allocation7 + $0xe0] sm:$0xf]
    %v1058 = vld [vmem:[#allocation7 + $0xe4] sm:$0xf]
    %v1059 = vld [vmem:[#allocation7 + $0xe8] sm:$0xf]
    %v1060 = vld [vmem:[#allocation7 + $0xec] sm:$0xf]
    %v1061 = vld [vmem:[#allocation7 + $0xf0] sm:$0xf]
    %v1062 = vld [vmem:[#allocation7 + $0xf4] sm:$0xf]
    %v1063 = vld [vmem:[#allocation7 + $0xf8] sm:$0xf]
    %v1064 = vld [vmem:[#allocation7 + $0xfc] sm:$0xf]
    %v1065 = vld [vmem:[#allocation7 + $0x100] sm:$0xf]
    %v1066 = vld [vmem:[#allocation7 + $0x104] sm:$0xf]
    %v1067 = vld [vmem:[#allocation7 + $0x108] sm:$0xf]
    %v1068 = vld [vmem:[#allocation7 + $0x10c] sm:$0xf]
    %v1069 = vld [vmem:[#allocation7 + $0x110] sm:$0xf]
    %v1070 = vld [vmem:[#allocation7 + $0x114] sm:$0xf]
    %v1071 = vld [vmem:[#allocation7 + $0x118] sm:$0xf]
    %v1072 = vld [vmem:[#allocation7 + $0x11c] sm:$0xf]
    %v1073 = vld [vmem:[#allocation7 + $0x120] sm:$0xf]
    %v1074 = vld [vmem:[#allocation7 + $0x124] sm:$0xf]
    %v1075 = vld [vmem:[#allocation7 + $0x128] sm:$0xf]
    %v1076 = vld [vmem:[%s4] sm:$0x1]
    %v1078 = vlaneseq
    %v1079 = vshrl.u32 %v1078, 7
    %v1080 = vsub.s32 0, %v1079
    %v1081 = vrot.slane %v1076, %v1080
    %v1158 = vunpack.c.l.b16 %v1001
    %v1159 = vunpack.c.l.b16 %v1002
    %v1160 = vunpack.c.l.b16 %v1003
    %v1161 = vunpack.c.l.b16 %v1004
    %v1162 = vunpack.c.l.b16 %v1005
    %v1163 = vunpack.c.l.b16 %v1006
    %v1164 = vunpack.c.l.b16 %v1007
    %v1165 = vunpack.c.l.b16 %v1008
    %v1166 = vunpack.c.l.b16 %v1009
    %v1167 = vunpack.c.l.b16 %v1010
    %v1168 = vunpack.c.l.b16 %v1011
    %v1169 = vunpack.c.l.b16 %v1012
    %v1170 = vunpack.c.l.b16 %v1013
    %v1171 = vunpack.c.l.b16 %v1014
    %v1172 = vunpack.c.l.b16 %v1015
    %v1173 = vunpack.c.l.b16 %v1016
    %v1174 = vunpack.c.l.b16 %v1017
    %v1175 = vunpack.c.l.b16 %v1018
    %v1176 = vunpack.c.l.b16 %v1019
    %v1177 = vunpack.c.l.b16 %v1020
    %v1178 = vunpack.c.l.b16 %v1021
    %v1179 = vunpack.c.l.b16 %v1022
    %v1180 = vunpack.c.l.b16 %v1023
    %v1181 = vunpack.c.l.b16 %v1024
    %v1182 = vunpack.c.l.b16 %v1025
    %v1183 = vunpack.c.l.b16 %v1026
    %v1184 = vunpack.c.l.b16 %v1027
    %v1185 = vunpack.c.l.b16 %v1028
    %v1186 = vunpack.c.l.b16 %v1029
    %v1187 = vunpack.c.l.b16 %v1030
    %v1188 = vunpack.c.l.b16 %v1031
    %v1189 = vunpack.c.l.b16 %v1032
    %v1190 = vunpack.c.l.b16 %v1033
    %v1191 = vunpack.c.l.b16 %v1034
    %v1192 = vunpack.c.l.b16 %v1035
    %v1193 = vunpack.c.l.b16 %v1036
    %v1194 = vunpack.c.l.b16 %v1037
    %v1195 = vunpack.c.l.b16 %v1038
    %v1196 = vunpack.c.l.b16 %v1039
    %v1197 = vunpack.c.l.b16 %v1040
    %v1198 = vunpack.c.l.b16 %v1041
    %v1199 = vunpack.c.l.b16 %v1042
    %v1200 = vunpack.c.l.b16 %v1043
    %v1201 = vunpack.c.l.b16 %v1044
    %v1202 = vunpack.c.l.b16 %v1045
    %v1203 = vunpack.c.l.b16 %v1046
    %v1204 = vunpack.c.l.b16 %v1047
    %v1205 = vunpack.c.l.b16 %v1048
    %v1206 = vunpack.c.l.b16 %v1049
    %v1207 = vunpack.c.l.b16 %v1050
    %v1208 = vunpack.c.l.b16 %v1051
    %v1209 = vunpack.c.l.b16 %v1052
    %v1210 = vunpack.c.l.b16 %v1053
    %v1211 = vunpack.c.l.b16 %v1054
    %v1212 = vunpack.c.l.b16 %v1055
    %v1213 = vunpack.c.l.b16 %v1056
    %v1214 = vunpack.c.l.b16 %v1057
    %v1215 = vunpack.c.l.b16 %v1058
    %v1216 = vunpack.c.l.b16 %v1059
    %v1217 = vunpack.c.l.b16 %v1060
    %v1218 = vunpack.c.l.b16 %v1061
    %v1219 = vunpack.c.l.b16 %v1062
    %v1220 = vunpack.c.l.b16 %v1063
    %v1221 = vunpack.c.l.b16 %v1064
    %v1222 = vunpack.c.l.b16 %v1065
    %v1223 = vunpack.c.l.b16 %v1066
    %v1224 = vunpack.c.l.b16 %v1067
    %v1225 = vunpack.c.l.b16 %v1068
    %v1226 = vunpack.c.l.b16 %v1069
    %v1227 = vunpack.c.l.b16 %v1070
    %v1228 = vunpack.c.l.b16 %v1071
    %v1229 = vunpack.c.l.b16 %v1072
    %v1230 = vunpack.c.l.b16 %v1073
    %v1231 = vunpack.c.l.b16 %v1074
    %v1232 = vunpack.c.l.b16 %v1075
    %v1233 = vpack.c.b16 %v1159, %v1158
    %v1234 = vpack.c.b16 %v1161, %v1160
    %v1235 = vpack.c.b16 %v1163, %v1162
    %v1236 = vpack.c.b16 %v1165, %v1164
    %v1237 = vpack.c.b16 %v1167, %v1166
    %v1238 = vpack.c.b16 %v1169, %v1168
    %v1239 = vpack.c.b16 %v1171, %v1170
    %v1240 = vpack.c.b16 %v1173, %v1172
    %v1241 = vpack.c.b16 %v1175, %v1174
    %v1242 = vpack.c.b16 %v1177, %v1176
    %v1243 = vpack.c.b16 %v1179, %v1178
    %v1244 = vpack.c.b16 %v1181, %v1180
    %v1245 = vpack.c.b16 %v1183, %v1182
    %v1246 = vpack.c.b16 %v1185, %v1184
    %v1247 = vpack.c.b16 %v1187, %v1186
    %v1248 = vpack.c.b16 %v1189, %v1188
    %v1249 = vpack.c.b16 %v1191, %v1190
    %v1250 = vpack.c.b16 %v1193, %v1192
    %v1251 = vpack.c.b16 %v1195, %v1194
    %v1252 = vpack.c.b16 %v1197, %v1196
    %v1253 = vpack.c.b16 %v1199, %v1198
    %v1254 = vpack.c.b16 %v1201, %v1200
    %v1255 = vpack.c.b16 %v1203, %v1202
    %v1256 = vpack.c.b16 %v1205, %v1204
    %v1257 = vpack.c.b16 %v1207, %v1206
    %v1258 = vpack.c.b16 %v1209, %v1208
    %v1259 = vpack.c.b16 %v1211, %v1210
    %v1260 = vpack.c.b16 %v1213, %v1212
    %v1261 = vpack.c.b16 %v1215, %v1214
    %v1262 = vpack.c.b16 %v1217, %v1216
    %v1263 = vpack.c.b16 %v1219, %v1218
    %v1264 = vpack.c.b16 %v1221, %v1220
    %v1265 = vpack.c.b16 %v1223, %v1222
    %v1266 = vpack.c.b16 %v1225, %v1224
    %v1267 = vpack.c.b16 %v1227, %v1226
    %v1268 = vpack.c.b16 %v1229, %v1228
    %v1269 = vpack.c.b16 %v1231, %v1230
    %v1270 = vpack.c.b16 %v1232, %v1232
    %vm1308 = vcmask 719872
    %v1310 = vsel %vm1308, %v1000, 0
    %vm1312 = vcmask 1043456
    %v1314 = vsel %vm1312, %v1270, 0
    %1316 = vmatprep.subr.bf16.mxu0 0
    %1317 = vmatpush1.bf16.msra.mxu0 %v1233
    %1318 = vmatprep.subr.bf16.mxu0 0
    %1319 = vmatpush1.bf16.msra.mxu0 %v1234
    %1320 = vmatprep.subr.bf16.mxu0 0
    %1321 = vmatpush1.bf16.msra.mxu0 %v1235
    %1322 = vmatprep.subr.bf16.mxu0 0
    %1323 = vmatpush1.bf16.msra.mxu0 %v1236
    %1324 = vmatprep.subr.bf16.mxu0 0
    %1325 = vmatpush1.bf16.msra.mxu0 %v1237
    %1326 = vmatprep.subr.bf16.mxu0 0
    %1327 = vmatpush1.bf16.msra.mxu0 %v1238
    %1328 = vmatprep.subr.bf16.mxu0 0
    %1329 = vmatpush1.bf16.msra.mxu0 %v1239
    %1330 = vmatprep.subr.bf16.mxu0 0
    %1331 = vmatpush1.bf16.msra.mxu0 %v1240
    %1332 = vmatprep.subr.bf16.mxu0 0
    %1333 = vmatpush1.bf16.msra.mxu0 %v1241
    %1334 = vmatprep.subr.bf16.mxu0 0
    %1335 = vmatpush1.bf16.msra.mxu0 %v1242
    %1336 = vmatprep.subr.bf16.mxu0 0
    %1337 = vmatpush1.bf16.msra.mxu0 %v1243
    %1338 = vmatprep.subr.bf16.mxu0 0
    %1339 = vmatpush1.bf16.msra.mxu0 %v1244
    %1340 = vmatprep.subr.bf16.mxu0 0
    %1341 = vmatpush1.bf16.msra.mxu0 %v1245
    %1342 = vmatprep.subr.bf16.mxu0 0
    %1343 = vmatpush1.bf16.msra.mxu0 %v1246
    %1344 = vmatprep.subr.bf16.mxu0 0
    %1345 = vmatpush1.bf16.msra.mxu0 %v1247
    %1346 = vmatprep.subr.bf16.mxu0 0
    %1347 = vmatpush1.bf16.msra.mxu0 %v1248
    %1348 = vmatprep.mubr.bf16.mxu0 %v997
    %1349 = vmatmul.mubr.bf16.gmra.mrb[0].mxu0 %v996
    %v1350 = vpop.f32.mrb[0].mxu0
    %v1351 = vadd.f32 %v1081, %v1350
    %v1352 = vpop.f32.mrb[0].mxu0
    %v1353 = vpop.f32.mrb[0].mxu0
    %v1354 = vadd.f32 %v1081, %v1353
    %v1355 = vpop.f32.mrb[0].mxu0
    %1356 = vdwg.mxu0
    %1357 = vmatprep.subr.bf16.mxu0 0
    %1358 = vmatpush1.bf16.msra.mxu0 %v1249
    %1359 = vmatprep.subr.bf16.mxu0 0
    %1360 = vmatpush1.bf16.msra.mxu0 %v1250
    %1361 = vmatprep.subr.bf16.mxu0 0
    %1362 = vmatpush1.bf16.msra.mxu0 %v1251
    %1363 = vmatprep.subr.bf16.mxu0 0
    %1364 = vmatpush1.bf16.msra.mxu0 %v1252
    %1365 = vmatprep.subr.bf16.mxu0 0
    %1366 = vmatpush1.bf16.msra.mxu0 %v1253
    %1367 = vmatprep.subr.bf16.mxu0 0
    %1368 = vmatpush1.bf16.msra.mxu0 %v1254
    %1369 = vmatprep.subr.bf16.mxu0 0
    %1370 = vmatpush1.bf16.msra.mxu0 %v1255
    %1371 = vmatprep.subr.bf16.mxu0 0
    %1372 = vmatpush1.bf16.msra.mxu0 %v1256
    %1373 = vmatprep.subr.bf16.mxu0 0
    %1374 = vmatpush1.bf16.msra.mxu0 %v1257
    %1375 = vmatprep.subr.bf16.mxu0 0
    %1376 = vmatpush1.bf16.msra.mxu0 %v1258
    %1377 = vmatprep.subr.bf16.mxu0 0
    %1378 = vmatpush1.bf16.msra.mxu0 %v1259
    %1379 = vmatprep.subr.bf16.mxu0 0
    %1380 = vmatpush1.bf16.msra.mxu0 %v1260
    %1381 = vmatprep.subr.bf16.mxu0 0
    %1382 = vmatpush1.bf16.msra.mxu0 %v1261
    %1383 = vmatprep.subr.bf16.mxu0 0
    %1384 = vmatpush1.bf16.msra.mxu0 %v1262
    %1385 = vmatprep.subr.bf16.mxu0 0
    %1386 = vmatpush1.bf16.msra.mxu0 %v1263
    %1387 = vmatprep.subr.bf16.mxu0 0
    %1388 = vmatpush1.bf16.msra.mxu0 %v1264
    %1389 = vmatprep.mubr.bf16.mxu0 %v999
    %1390 = vmatmul.mubr.bf16.gmra.mrb[0].mxu0 %v998
    %v1391 = vpop.f32.mrb[0].mxu0
    %v1392 = vadd.f32 %v1351, %v1391
    %v1393 = vpop.f32.mrb[0].mxu0
    %v1394 = vpop.f32.mrb[0].mxu0
    %v1395 = vadd.f32 %v1354, %v1394
    %v1396 = vpop.f32.mrb[0].mxu0
    %1397 = vdwg.mxu0
    %1398 = vmatprep.subr.bf16.mxu0 0
    %1399 = vmatpush1.bf16.msra.mxu0 %v1265
    %1400 = vmatprep.subr.bf16.mxu0 0
    %1401 = vmatpush1.bf16.msra.mxu0 %v1266
    %1402 = vmatprep.subr.bf16.mxu0 0
    %1403 = vmatpush1.bf16.msra.mxu0 %v1267
    %1404 = vmatprep.subr.bf16.mxu0 0
    %1405 = vmatpush1.bf16.msra.mxu0 %v1268
    %1406 = vmatprep.subr.bf16.mxu0 0
    %1407 = vmatpush1.bf16.msra.mxu0 %v1269
    %1408 = vmatprep.subr.bf16.mxu0 0
    %1409 = vmatpush1.bf16.msra.mxu0 %v1314
    %1410 = vmatprep.subr.bf16.mxu0 0
    %1411 = vmatpush1.bf16.msra.mxu0 0
    %1412 = vmatprep.subr.bf16.mxu0 0
    %1413 = vmatpush1.bf16.msra.mxu0 0
    %1414 = vmatprep.subr.bf16.mxu0 0
    %1415 = vmatpush1.bf16.msra.mxu0 0
    %1416 = vmatprep.subr.bf16.mxu0 0
    %1417 = vmatpush1.bf16.msra.mxu0 0
    %1418 = vmatprep.subr.bf16.mxu0 0
    %1419 = vmatpush1.bf16.msra.mxu0 0
    %1420 = vmatprep.subr.bf16.mxu0 0
    %1421 = vmatpush1.bf16.msra.mxu0 0
    %1422 = vmatprep.subr.bf16.mxu0 0
    %1423 = vmatpush1.bf16.msra.mxu0 0
    %1424 = vmatprep.subr.bf16.mxu0 0
    %1425 = vmatpush1.bf16.msra.mxu0 0
    %1426 = vmatprep.subr.bf16.mxu0 0
    %1427 = vmatpush1.bf16.msra.mxu0 0
    %1428 = vmatprep.subr.bf16.mxu0 0
    %1429 = vmatpush1.bf16.msra.mxu0 0
    %1430 = vmatprep.mubr.bf16.mxu0 0
    %1431 = vmatmul.mubr.bf16.gmra.mrb[0].mxu0 %v1310
    %v1432 = vpop.f32.mrb[0].mxu0
    %v1433 = vadd.f32 %v1392, %v1432
    %v1434 = vpop.f32.mrb[0].mxu0
    %v1435 = vpop.f32.mrb[0].mxu0
    %v1436 = vadd.f32 %v1395, %v1435
    %v1437 = vpop.f32.mrb[0].mxu0
    %1438 = vdwg.mxu0
    %1441 = vrot.lane.b32.xlu0 %v1433, 127
    %v1442 = vpop.permute.xlu0 %1441
    %1443 = vrot.lane.b32.xlu0 %v1436, 127
    %v1444 = vpop.permute.xlu0 %1443
    %v1447 = vmax.f32 %v1433, %v1442
    %v1448 = vmax.f32 %v1436, %v1444
    %v1449 = vsub.f32 %v1433, %v1442
    %v1450 = vsub.f32 %v1436, %v1444
    %v1451 = vand.u32 2147483647, %v1449
    %v1452 = vand.u32 2147483647, %v1450
    %v1453 = vsub.f32 0.0, %v1451
    %v1454 = vsub.f32 0.0, %v1452
    %v1455 = vmul.f32 %v1453, 1.442695
    %v1456 = vpow.pop %v1455
    %v1457 = vmul.f32 %v1454, 1.442695
    %v1458 = vpow.pop %v1457
    %v1459 = vadd.f32 %v1456, 1.0
    %v1460 = vadd.f32 %v1458, 1.0
    %v1461 = vlog2.pop %v1459
    %v1462 = vmul.f32 %v1461, 0.6931472
    %v1463 = vlog2.pop %v1460
    %v1464 = vmul.f32 %v1463, 0.6931472
    %v1465 = vadd.f32 %v1447, %v1462
    %v1466 = vadd.f32 %v1448, %v1464
    %1468 = vset.pattern.permute.xlu0 0
    %1469 = vperm.xlu0 %1468, %v1465
    %v1470 = vpop.permute.xlu0 %1469
    %1473 = vset.pattern.permute.xlu0 0
    %1474 = vperm.xlu0 %1473, %v1466
    %v1475 = vpop.permute.xlu0 %1474
    %v1477 = vsub.f32 %v1433, %v1470
    %v1478 = vsub.f32 %v1436, %v1475
    %1479 = vst [vmem:[#allocation8] sm:$0xff] %v1477
    %1480 = vst [vmem:[#allocation8 + $0x8] sm:$0xff] %v1478
    // Predicated region
    $region34: #{tpu_custom_call.1} parent=1 // pred_check
      _
    $region35: #{tpu_custom_call.1} parent=1 // pred_check_branch
      %1482 = sbr.rel (0) target = $region37
    $region36: #{tpu_custom_call.1} parent=1 // pred_region
      %s1484 = ssub.s32 256, 256
      %1485 = vsyncadd [#allocation4], %s1484
      %s1486 = sshll.u32 [#allocation8], 4
      %s1487 = int_to_ptr.vmem [resolvable:$true] %s1486
      %1492 = dma.vmem_to_hbm [thread:$0]  %s1487, 256, %s5, [#allocation4], 128, 128, 8
    $region37: #{tpu_custom_call.1} parent=1 // pred_fallthru
      _
    // Predicated region
    $region38: #{tpu_custom_call.1} parent=1 // pred_check
      _
    $region39: #{tpu_custom_call.1} parent=1 // pred_check_branch
      %1494 = sbr.rel (0) target = $region41
    $region40: #{tpu_custom_call.1} parent=1 // pred_region
      %1495 = dma.done [#allocation4], 256
    $region41: #{tpu_custom_call.1} parent=1 // pred_fallthru
      _
    %1496 = vsyncpa [#allocation3], 1
    %1497 = vsyncpa [#allocation6], 1
    %1498 = vsyncpa [#allocation4], 1

</llo_original>
